<compile_context>
chip_gen: v7x
topology: tpu7x:2x2x1
jax: 0.10.0
libtpu: 0.0.40
codegen_flags: <defaults>
</compile_context>

<pallas_src>
import functools

import jax
import jax.numpy as jnp
from jax.experimental import pallas as pl
from jax.experimental.pallas import tpu as pltpu


# --------------------------------------------------------------------------
# Kernel: fused MLP over one batch tile.
# refs = (x_ref, w0, b0, w1, b1, ..., w_{L-1}, b_{L-1}, out_ref)
#   w_l : [in_l, out_l] bf16 (pre-transposed)     b_l : [1, out_l] f32
# --------------------------------------------------------------------------
def mlp_kernel(x_ref, *refs, num_layers):
    out_ref = refs[-1]
    wb = refs[:-1]

    h = x_ref[...]                                       # [bb, D] bf16
    for l in range(num_layers):
        w = wb[2 * l][...]                               # [in_l, out_l] bf16
        b = wb[2 * l + 1][...]                           # [1, out_l]    f32
        acc = jnp.dot(h, w, preferred_element_type=jnp.float32) + b
        if l < num_layers - 1:
            # ReLU (Dropout is identity at inference); keep f32, feed MXU bf16.
            h = jnp.maximum(acc, 0.0).astype(jnp.bfloat16)
        else:
            h = acc                                      # final layer: f32
    out_ref[...] = h.astype(out_ref.dtype)


# --------------------------------------------------------------------------
# One-time parameter preparation (hoisted out of the per-call hot path).
# PyTorch convention weights [out, in] -> [in, out] bf16; biases -> [1, out] f32.
# --------------------------------------------------------------------------
def prepare_params(params):
    ws = tuple(jnp.asarray(w, jnp.float32).T.astype(jnp.bfloat16)
               for w in params["weights"])
    bs = tuple(jnp.asarray(b, jnp.float32).reshape(1, -1)
               for b in params["biases"])
    return {"ws": ws, "bs": bs}


def _choose_tile(batch):
    """Pick an 8-aligned batch tile and the padded batch size."""
    pad8 = ((batch + 7) // 8) * 8
    bb = min(1024, pad8)                      # big tiles: ~85%+ of HBM roofline
    if pad8 > 64:
        # v7x has 2 TensorCores: make sure the "parallel" grid has >= 2 steps
        # for any non-trivial batch (don't split tiny batches).
        half8 = ((pad8 // 2 + 7) // 8) * 8
        bb = min(bb, max(half8, 8))
    bb = max(bb, 8)
    padded_b = ((batch + bb - 1) // bb) * bb  # pad up instead of divisor search
    return bb, padded_b


# --------------------------------------------------------------------------
# Forward pass.  `prepared` comes from prepare_params(); jit the whole thing.
# --------------------------------------------------------------------------
@functools.partial(jax.jit, static_argnames=("force_pallas",))
def metadata_encoder(x, prepared, force_pallas=False):
    ws, bs = prepared["ws"], prepared["bs"]
    num_layers = len(ws)
    B, D = x.shape
    E = ws[-1].shape[1]

    bb, padded_B = _choose_tile(B)

    # ---- small-batch fallback: pallas_call fixed cost would dominate ----
    if (not force_pallas) and padded_B <= 64:
        h = x.astype(jnp.bfloat16)
        for l in range(num_layers):
            acc = jnp.dot(h, ws[l], preferred_element_type=jnp.float32) + bs[l]
            if l < num_layers - 1:
                h = jnp.maximum(acc, 0.0).astype(jnp.bfloat16)
            else:
                h = acc
        return h

    # ---- pad batch to a multiple of the tile (rows sliced off at the end) ----
    x_p = x.astype(jnp.bfloat16)
    if padded_B != B:
        x_p = jnp.pad(x_p, ((0, padded_B - B), (0, 0)))

    # ---- weight / bias specs: constant index_map -> VMEM resident ----
    weight_bytes = sum(int(w.size) * 2 + int(b.size) * 4 for w, b in zip(ws, bs))
    # Only bother with single-buffering when the weights are actually big
    # (matters on v7x's 64 MiB VMEM; irrelevant at 16/64/32 dims).
    single_buffer = weight_bytes > (4 << 20)
    wb_args, wb_specs = [], []
    for w, b in zip(ws, bs):
        kw = dict(pipeline_mode=pl.Buffered(1)) if single_buffer else {}
        wb_args += [w, b]
        wb_specs += [
            pl.BlockSpec(w.shape, lambda i: (0, 0), **kw),
            pl.BlockSpec(b.shape, lambda i: (0, 0), **kw),
        ]

    # ---- VMEM budget: only raise the scoped limit if we actually need to ----
    io_bytes = 2 * (bb * D * 2) + 2 * (bb * E * 4)        # double-buffered tiles
    needed = io_bytes + (1 if single_buffer else 2) * weight_bytes
    vmem_limit = None
    if 2 * needed > (16 << 20):                            # v5e default scoped
        vmem_limit = int(min(2 * needed, 100 << 20))

    flops = 2 * padded_B * sum(int(w.shape[0]) * int(w.shape[1]) for w in ws)
    bytes_accessed = padded_B * D * 2 + weight_bytes + padded_B * E * 4

    out = pl.pallas_call(
        functools.partial(mlp_kernel, num_layers=num_layers),
        out_shape=jax.ShapeDtypeStruct((padded_B, E), jnp.float32),
        grid=(padded_B // bb,),
        in_specs=[pl.BlockSpec((bb, D), lambda i: (i, 0))] + wb_specs,
        out_specs=pl.BlockSpec((bb, E), lambda i: (i, 0)),
        compiler_params=pltpu.CompilerParams(
            dimension_semantics=("parallel",),
            vmem_limit_bytes=vmem_limit),
        cost_estimate=pl.CostEstimate(
            flops=flops, transcendentals=0, bytes_accessed=bytes_accessed),
    )(x_p, *wb_args)

    return out[:B]


# --------------------------------------------------------------------------
# PyTorch nn.Linear-style init: U(-1/sqrt(fan_in), 1/sqrt(fan_in)).
# --------------------------------------------------------------------------
def init_params(key, input_dim, hidden_dims, embed_dim):
    dims = [input_dim] + list(hidden_dims) + [embed_dim]
    n_layers = len(dims) - 1
    keys = jax.random.split(key, 2 * n_layers)
    weights, biases = [], []
    for l in range(n_layers):
        fan_in, fan_out = dims[l], dims[l + 1]
        k = 1.0 / jnp.sqrt(jnp.float32(fan_in))
        w = jax.random.uniform(keys[2 * l], (fan_out, fan_in), jnp.float32, -k, k)
        b = jax.random.uniform(keys[2 * l + 1], (fan_out,), jnp.float32, -k, k)
        weights.append(w)
        biases.append(b)
    return {"weights": weights, "biases": biases}


if __name__ == "__main__":
    B = 2                       # batch_size
    input_dim = 16              # metadata feature count
    hidden_dims = [64, 32]      # MLP hidden dims
    embed_dim = 32              # output embedding dim

    root = jax.random.PRNGKey(0)
    kx, kp = jax.random.split(root)
    x = jax.random.normal(kx, (B, input_dim), jnp.float32)
    params = init_params(kp, input_dim, hidden_dims, embed_dim)
    prepared = prepare_params(params)           # one-time layout/dtype work

    # Force the Pallas path even at this tiny batch so the kernel is exercised.
    out = metadata_encoder(x, prepared, force_pallas=True)   # [B, embed_dim]
    out = jax.block_until_ready(out)
    assert out.shape == (B, embed_dim) and out.dtype == jnp.float32

    # Pure-JAX f32 reference (PyTorch semantics, dropout=identity at inference).
    ref = x
    for l, (w, b) in enumerate(zip(params["weights"], params["biases"])):
        ref = ref @ w.T + b
        if l < len(params["weights"]) - 1:
            ref = jnp.maximum(ref, 0.0)
    assert jnp.allclose(out, ref, rtol=2e-2, atol=2e-2), "mismatch vs reference"

    print("KERNEL_OK")
</pallas_src>

<mosaic_0001>
module attributes {stable_mosaic.version = 11 : i64} {
  func.func @mlp_kernel(%arg0: i32, %arg1: memref<8x16xbf16, #tpu.memory_space<vmem>>, %arg2: memref<16x64xbf16, #tpu.memory_space<vmem>>, %arg3: memref<1x64xf32, #tpu.memory_space<vmem>>, %arg4: memref<64x32xbf16, #tpu.memory_space<vmem>>, %arg5: memref<1x32xf32, #tpu.memory_space<vmem>>, %arg6: memref<32x32xbf16, #tpu.memory_space<vmem>>, %arg7: memref<1x32xf32, #tpu.memory_space<vmem>>, %arg8: memref<8x32xf32, #tpu.memory_space<vmem>>) attributes {dimension_semantics = [#tpu.dimension_semantics<parallel>], iteration_bounds = array<i64: 1>, scalar_prefetch = 0 : i64, scratch_operands = 0 : i64, tpu.core_type = #tpu.core_type<tc>, window_params = [{transform_indices = @transform_0, window_bounds = array<i64: 8, 16>}, {pipeline_mode = #tpu.pipeline_mode<synchronous>, transform_indices = @transform_1, window_bounds = array<i64: 16, 64>}, {pipeline_mode = #tpu.pipeline_mode<synchronous>, transform_indices = @transform_2, window_bounds = array<i64: 1, 64>}, {pipeline_mode = #tpu.pipeline_mode<synchronous>, transform_indices = @transform_3, window_bounds = array<i64: 64, 32>}, {pipeline_mode = #tpu.pipeline_mode<synchronous>, transform_indices = @transform_4, window_bounds = array<i64: 1, 32>}, {pipeline_mode = #tpu.pipeline_mode<synchronous>, transform_indices = @transform_5, window_bounds = array<i64: 32, 32>}, {pipeline_mode = #tpu.pipeline_mode<synchronous>, transform_indices = @transform_6, window_bounds = array<i64: 1, 32>}, {transform_indices = @transform_7, window_bounds = array<i64: 8, 32>}]} {
    %c0 = arith.constant 0 : index
    %c0_0 = arith.constant 0 : index
    %0 = vector.load %arg1[%c0, %c0_0] : memref<8x16xbf16, #tpu.memory_space<vmem>>, vector<8x16xbf16>
    %c0_1 = arith.constant 0 : index
    %c0_2 = arith.constant 0 : index
    %1 = vector.load %arg2[%c0_1, %c0_2] : memref<16x64xbf16, #tpu.memory_space<vmem>>, vector<16x64xbf16>
    %c0_3 = arith.constant 0 : index
    %c0_4 = arith.constant 0 : index
    %2 = vector.load %arg3[%c0_3, %c0_4] : memref<1x64xf32, #tpu.memory_space<vmem>>, vector<1x64xf32>
    %cst = arith.constant dense<0.000000e+00> : vector<8x64xf32>
    %3 = tpu.matmul %0, %1, %cst {dimension_numbers = #tpu.dot_dimension_numbers<[1], [0], [0], [1], [0, 0, 1, 1], [], []>} : vector<8x16xbf16>, vector<16x64xbf16>, vector<8x64xf32> -> vector<8x64xf32>
    %4 = vector.broadcast %2 : vector<1x64xf32> to vector<8x64xf32>
    %5 = arith.addf %3, %4 : vector<8x64xf32>
    %cst_5 = arith.constant 0.000000e+00 : f32
    %6 = vector.broadcast %cst_5 : f32 to vector<8x64xf32>
    %7 = arith.maximumf %5, %6 : vector<8x64xf32>
    %8 = arith.truncf %7 : vector<8x64xf32> to vector<8x64xbf16>
    %c0_6 = arith.constant 0 : index
    %c0_7 = arith.constant 0 : index
    %9 = vector.load %arg4[%c0_6, %c0_7] : memref<64x32xbf16, #tpu.memory_space<vmem>>, vector<64x32xbf16>
    %c0_8 = arith.constant 0 : index
    %c0_9 = arith.constant 0 : index
    %10 = vector.load %arg5[%c0_8, %c0_9] : memref<1x32xf32, #tpu.memory_space<vmem>>, vector<1x32xf32>
    %cst_10 = arith.constant dense<0.000000e+00> : vector<8x32xf32>
    %11 = tpu.matmul %8, %9, %cst_10 {dimension_numbers = #tpu.dot_dimension_numbers<[1], [0], [0], [1], [0, 0, 1, 1], [], []>} : vector<8x64xbf16>, vector<64x32xbf16>, vector<8x32xf32> -> vector<8x32xf32>
    %12 = vector.broadcast %10 : vector<1x32xf32> to vector<8x32xf32>
    %13 = arith.addf %11, %12 : vector<8x32xf32>
    %cst_11 = arith.constant 0.000000e+00 : f32
    %14 = vector.broadcast %cst_11 : f32 to vector<8x32xf32>
    %15 = arith.maximumf %13, %14 : vector<8x32xf32>
    %16 = arith.truncf %15 : vector<8x32xf32> to vector<8x32xbf16>
    %c0_12 = arith.constant 0 : index
    %c0_13 = arith.constant 0 : index
    %17 = vector.load %arg6[%c0_12, %c0_13] : memref<32x32xbf16, #tpu.memory_space<vmem>>, vector<32x32xbf16>
    %c0_14 = arith.constant 0 : index
    %c0_15 = arith.constant 0 : index
    %18 = vector.load %arg7[%c0_14, %c0_15] : memref<1x32xf32, #tpu.memory_space<vmem>>, vector<1x32xf32>
    %cst_16 = arith.constant dense<0.000000e+00> : vector<8x32xf32>
    %19 = tpu.matmul %16, %17, %cst_16 {dimension_numbers = #tpu.dot_dimension_numbers<[1], [0], [0], [1], [0, 0, 1, 1], [], []>} : vector<8x32xbf16>, vector<32x32xbf16>, vector<8x32xf32> -> vector<8x32xf32>
    %20 = vector.broadcast %18 : vector<1x32xf32> to vector<8x32xf32>
    %21 = arith.addf %19, %20 : vector<8x32xf32>
    %c0_17 = arith.constant 0 : index
    %c0_18 = arith.constant 0 : index
    %22 = vector.load %arg8[%c0_17, %c0_18] : memref<8x32xf32, #tpu.memory_space<vmem>>, vector<8x32xf32>
    tpu.vector_store %arg8[%c0_17, %c0_18], %21 {strides = array<i32>} : memref<8x32xf32, #tpu.memory_space<vmem>>, vector<8x32xf32>,
    return
  }
  func.func @transform_0(%arg0: i32) -> (i32, i32) {
    %c0_i32 = arith.constant 0 : i32
    %c0_i32_0 = arith.constant 0 : i32
    return %arg0, %c0_i32 : i32, i32
  }
  func.func @transform_1(%arg0: i32) -> (i32, i32) {
    %c0_i32 = arith.constant 0 : i32
    %c0_i32_0 = arith.constant 0 : i32
    %c0_i32_1 = arith.constant 0 : i32
    return %c0_i32, %c0_i32_0 : i32, i32
  }
  func.func @transform_2(%arg0: i32) -> (i32, i32) {
    %c0_i32 = arith.constant 0 : i32
    %c0_i32_0 = arith.constant 0 : i32
    %c0_i32_1 = arith.constant 0 : i32
    return %c0_i32, %c0_i32_0 : i32, i32
  }
  func.func @transform_3(%arg0: i32) -> (i32, i32) {
    %c0_i32 = arith.constant 0 : i32
    %c0_i32_0 = arith.constant 0 : i32
    %c0_i32_1 = arith.constant 0 : i32
    return %c0_i32, %c0_i32_0 : i32, i32
  }
  func.func @transform_4(%arg0: i32) -> (i32, i32) {
    %c0_i32 = arith.constant 0 : i32
    %c0_i32_0 = arith.constant 0 : i32
    %c0_i32_1 = arith.constant 0 : i32
    return %c0_i32, %c0_i32_0 : i32, i32
  }
  func.func @transform_5(%arg0: i32) -> (i32, i32) {
    %c0_i32 = arith.constant 0 : i32
    %c0_i32_0 = arith.constant 0 : i32
    %c0_i32_1 = arith.constant 0 : i32
    return %c0_i32, %c0_i32_0 : i32, i32
  }
  func.func @transform_6(%arg0: i32) -> (i32, i32) {
    %c0_i32 = arith.constant 0 : i32
    %c0_i32_0 = arith.constant 0 : i32
    %c0_i32_1 = arith.constant 0 : i32
    return %c0_i32, %c0_i32_0 : i32, i32
  }
  func.func @transform_7(%arg0: i32) -> (i32, i32) {
    %c0_i32 = arith.constant 0 : i32
    %c0_i32_0 = arith.constant 0 : i32
    return %arg0, %c0_i32 : i32, i32
  }
}

</mosaic_0001>

<llo_original>
// kernel: metadata_encoder.1
$region0: #{metadata_encoder.1}
  #allocation0 [shape = 'u32[]', space=smem, size = 0x4, offset = 0x4, fixed_abs, tag = 'smem constant byte address 0x4 - core index']
  #allocation1 [shape = 'u32[144,128]{1,0:T(1,128)}', space=vmem, size = 0x12000, scoped, tag = 'internal scratch']
  %s0 = inlined_call_operand.vmem [shape: bf16[8,16], index: 0, kind: input, shape index: {}]
  %s1 = inlined_call_operand.vmem [shape: bf16[16,64], index: 1, kind: input, shape index: {}]
  %s2 = inlined_call_operand.vmem [shape: f32[1,64], index: 2, kind: input, shape index: {}]
  %s3 = inlined_call_operand.vmem [shape: bf16[64,32], index: 3, kind: input, shape index: {}]
  %s4 = inlined_call_operand.vmem [shape: f32[1,32], index: 4, kind: input, shape index: {}]
  %s5 = inlined_call_operand.vmem [shape: bf16[32,32], index: 5, kind: input, shape index: {}]
  %s6 = inlined_call_operand.vmem [shape: f32[1,32], index: 6, kind: input, shape index: {}]
  %s7 = inlined_call_operand.vmem [shape: f32[8,32], index: 7, kind: output, shape index: {}]
  %s8 = sld [smem:[#allocation0]]
  $region38: #{metadata_encoder.1} parent=0
    _
  %s10 = ssub.s32 1, %s8
  %s11 = scalar_select 0, %s10, %s8
  // Predicated region
  $region2: #{metadata_encoder.1} parent=0 // pred_check
    _
  $region3: #{metadata_encoder.1} parent=0 // pred_check_branch
    %13 = sbr.rel (0) target = $region5
  $region4: #{metadata_encoder.1} parent=0 // pred_region
    _
  $region5: #{metadata_encoder.1} parent=0 // pred_fallthru
    _
  // Predicated region
  $region6: #{metadata_encoder.1} parent=0 // pred_check
    _
  $region7: #{metadata_encoder.1} parent=0 // pred_check_branch
    %15 = sbr.rel (0) target = $region9
  $region8: #{metadata_encoder.1} parent=0 // pred_region
    _
  $region9: #{metadata_encoder.1} parent=0 // pred_fallthru
    _
  // Predicated region
  $region10: #{metadata_encoder.1} parent=0 // pred_check
    _
  $region11: #{metadata_encoder.1} parent=0 // pred_check_branch
    %17 = sbr.rel (0) target = $region13
  $region12: #{metadata_encoder.1} parent=0 // pred_region
    _
  $region13: #{metadata_encoder.1} parent=0 // pred_fallthru
    _
  // Predicated region
  $region14: #{metadata_encoder.1} parent=0 // pred_check
    _
  $region15: #{metadata_encoder.1} parent=0 // pred_check_branch
    %19 = sbr.rel (0) target = $region17
  $region16: #{metadata_encoder.1} parent=0 // pred_region
    _
  $region17: #{metadata_encoder.1} parent=0 // pred_fallthru
    _
  // Predicated region
  $region18: #{metadata_encoder.1} parent=0 // pred_check
    _
  $region19: #{metadata_encoder.1} parent=0 // pred_check_branch
    %21 = sbr.rel (0) target = $region21
  $region20: #{metadata_encoder.1} parent=0 // pred_region
    _
  $region21: #{metadata_encoder.1} parent=0 // pred_fallthru
    _
  // Predicated region
  $region22: #{metadata_encoder.1} parent=0 // pred_check
    _
  $region23: #{metadata_encoder.1} parent=0 // pred_check_branch
    %23 = sbr.rel (0) target = $region25
  $region24: #{metadata_encoder.1} parent=0 // pred_region
    _
  $region25: #{metadata_encoder.1} parent=0 // pred_fallthru
    _
  // Predicated region
  $region26: #{metadata_encoder.1} parent=0 // pred_check
    _
  $region27: #{metadata_encoder.1} parent=0 // pred_check_branch
    %25 = sbr.rel (0) target = $region29
  $region28: #{metadata_encoder.1} parent=0 // pred_region
    _
  $region29: #{metadata_encoder.1} parent=0 // pred_fallthru
    _
  %v27 = vld [vmem:[%s0] sm:$0xf]
  %v28 = vld [vmem:[%s1] sm:$0xf]
  %v29 = vld [vmem:[%s1 + $0x4] sm:$0xf]
  %v30 = vld [vmem:[%s2] sm:$0x1]
  %v32 = vlaneseq
  %v33 = vshrl.u32 %v32, 7
  %v34 = vsub.s32 0, %v33
  %v35 = vrot.slane %v30, %v34
  %v39 = vunpack.c.l.b16 %v28
  %v40 = vunpack.c.l.b16 %v29
  %v41 = vpack.c.b16 %v40, %v39
  %vm43 = vcmask 130048
  %v45 = vsel %vm43, %v27, 0
  %47 = vmatprep.subr.bf16.mxu0 0
  %48 = vmatpush1.bf16.msra.mxu0 %v41
  %49 = vmatprep.subr.bf16.mxu0 0
  %50 = vmatpush1.bf16.msra.mxu0 0
  %51 = vmatprep.subr.bf16.mxu0 0
  %52 = vmatpush1.bf16.msra.mxu0 0
  %53 = vmatprep.subr.bf16.mxu0 0
  %54 = vmatpush1.bf16.msra.mxu0 0
  %55 = vmatprep.subr.bf16.mxu0 0
  %56 = vmatpush1.bf16.msra.mxu0 0
  %57 = vmatprep.subr.bf16.mxu0 0
  %58 = vmatpush1.bf16.msra.mxu0 0
  %59 = vmatprep.subr.bf16.mxu0 0
  %60 = vmatpush1.bf16.msra.mxu0 0
  %61 = vmatprep.subr.bf16.mxu0 0
  %62 = vmatpush1.bf16.msra.mxu0 0
  %63 = vmatprep.subr.bf16.mxu0 0
  %64 = vmatpush1.bf16.msra.mxu0 0
  %65 = vmatprep.subr.bf16.mxu0 0
  %66 = vmatpush1.bf16.msra.mxu0 0
  %67 = vmatprep.subr.bf16.mxu0 0
  %68 = vmatpush1.bf16.msra.mxu0 0
  %69 = vmatprep.subr.bf16.mxu0 0
  %70 = vmatpush1.bf16.msra.mxu0 0
  %71 = vmatprep.subr.bf16.mxu0 0
  %72 = vmatpush1.bf16.msra.mxu0 0
  %73 = vmatprep.subr.bf16.mxu0 0
  %74 = vmatpush1.bf16.msra.mxu0 0
  %75 = vmatprep.subr.bf16.mxu0 0
  %76 = vmatpush1.bf16.msra.mxu0 0
  %77 = vmatprep.subr.bf16.mxu0 0
  %78 = vmatpush1.bf16.msra.mxu0 0
  %79 = vmatprep.mubr.bf16.mxu0 0
  %80 = vmatmul.mubr.bf16.gmra.mrb[0].mxu0 %v45
  %v81 = vpop.f32.mrb[0].mxu0
  %v82 = vadd.f32 %v35, %v81
  %v83 = vpop.f32.mrb[0].mxu0
  %v84 = vpop.f32.mrb[0].mxu0
  %v85 = vpop.f32.mrb[0].mxu0
  %86 = vdwg.mxu0
  %v87 = vmax.f32 %v82, 0.0
  %v88 = vpack.c.bf16 %v87, %v87
  %v89 = vld [vmem:[%s3] sm:$0xf]
  %v90 = vld [vmem:[%s3 + $0x4] sm:$0xf]
  %v91 = vld [vmem:[%s3 + $0x8] sm:$0xf]
  %v92 = vld [vmem:[%s3 + $0xc] sm:$0xf]
  %v93 = vld [vmem:[%s3 + $0x10] sm:$0xf]
  %v94 = vld [vmem:[%s3 + $0x14] sm:$0xf]
  %v95 = vld [vmem:[%s3 + $0x18] sm:$0xf]
  %v96 = vld [vmem:[%s3 + $0x1c] sm:$0xf]
  %v97 = vld [vmem:[%s4] sm:$0x1]
  %v99 = vlaneseq
  %v100 = vshrl.u32 %v99, 7
  %v101 = vsub.s32 0, %v100
  %v102 = vrot.slane %v97, %v101
  %v112 = vunpack.c.l.b16 %v89
  %v113 = vunpack.c.l.b16 %v90
  %v114 = vunpack.c.l.b16 %v91
  %v115 = vunpack.c.l.b16 %v92
  %v116 = vunpack.c.l.b16 %v93
  %v117 = vunpack.c.l.b16 %v94
  %v118 = vunpack.c.l.b16 %v95
  %v119 = vunpack.c.l.b16 %v96
  %v120 = vpack.c.b16 %v113, %v112
  %v121 = vpack.c.b16 %v115, %v114
  %v122 = vpack.c.b16 %v117, %v116
  %v123 = vpack.c.b16 %v119, %v118
  %vm128 = vcmask 523264
  %v130 = vsel %vm128, %v88, 0
  %132 = vmatprep.subr.bf16.mxu0 0
  %133 = vmatpush1.bf16.msra.mxu0 %v120
  %134 = vmatprep.subr.bf16.mxu0 0
  %135 = vmatpush1.bf16.msra.mxu0 %v121
  %136 = vmatprep.subr.bf16.mxu0 0
  %137 = vmatpush1.bf16.msra.mxu0 %v122
  %138 = vmatprep.subr.bf16.mxu0 0
  %139 = vmatpush1.bf16.msra.mxu0 %v123
  %140 = vmatprep.subr.bf16.mxu0 0
  %141 = vmatpush1.bf16.msra.mxu0 0
  %142 = vmatprep.subr.bf16.mxu0 0
  %143 = vmatpush1.bf16.msra.mxu0 0
  %144 = vmatprep.subr.bf16.mxu0 0
  %145 = vmatpush1.bf16.msra.mxu0 0
  %146 = vmatprep.subr.bf16.mxu0 0
  %147 = vmatpush1.bf16.msra.mxu0 0
  %148 = vmatprep.subr.bf16.mxu0 0
  %149 = vmatpush1.bf16.msra.mxu0 0
  %150 = vmatprep.subr.bf16.mxu0 0
  %151 = vmatpush1.bf16.msra.mxu0 0
  %152 = vmatprep.subr.bf16.mxu0 0
  %153 = vmatpush1.bf16.msra.mxu0 0
  %154 = vmatprep.subr.bf16.mxu0 0
  %155 = vmatpush1.bf16.msra.mxu0 0
  %156 = vmatprep.subr.bf16.mxu0 0
  %157 = vmatpush1.bf16.msra.mxu0 0
  %158 = vmatprep.subr.bf16.mxu0 0
  %159 = vmatpush1.bf16.msra.mxu0 0
  %160 = vmatprep.subr.bf16.mxu0 0
  %161 = vmatpush1.bf16.msra.mxu0 0
  %162 = vmatprep.subr.bf16.mxu0 0
  %163 = vmatpush1.bf16.msra.mxu0 0
  %164 = vmatprep.mubr.bf16.mxu0 0
  %165 = vmatmul.mubr.bf16.gmra.mrb[0].mxu0 %v130
  %v166 = vpop.f32.mrb[0].mxu0
  %v167 = vadd.f32 %v102, %v166
  %v168 = vpop.f32.mrb[0].mxu0
  %v169 = vpop.f32.mrb[0].mxu0
  %v170 = vpop.f32.mrb[0].mxu0
  %171 = vdwg.mxu0
  %v172 = vmax.f32 %v167, 0.0
  %v173 = vpack.c.bf16 %v172, %v172
  %v174 = vld [vmem:[%s5] sm:$0xf]
  %v175 = vld [vmem:[%s5 + $0x4] sm:$0xf]
  %v176 = vld [vmem:[%s5 + $0x8] sm:$0xf]
  %v177 = vld [vmem:[%s5 + $0xc] sm:$0xf]
  %v178 = vld [vmem:[%s6] sm:$0x1]
  %v180 = vlaneseq
  %v181 = vshrl.u32 %v180, 7
  %v182 = vsub.s32 0, %v181
  %v183 = vrot.slane %v178, %v182
  %v189 = vunpack.c.l.b16 %v174
  %v190 = vunpack.c.l.b16 %v175
  %v191 = vunpack.c.l.b16 %v176
  %v192 = vunpack.c.l.b16 %v177
  %v193 = vpack.c.b16 %v190, %v189
  %v194 = vpack.c.b16 %v192, %v191
  %vm197 = vcmask 261120
  %v199 = vsel %vm197, %v173, 0
  %201 = vmatprep.subr.bf16.mxu0 0
  %202 = vmatpush1.bf16.msra.mxu0 %v193
  %203 = vmatprep.subr.bf16.mxu0 0
  %204 = vmatpush1.bf16.msra.mxu0 %v194
  %205 = vmatprep.subr.bf16.mxu0 0
  %206 = vmatpush1.bf16.msra.mxu0 0
  %207 = vmatprep.subr.bf16.mxu0 0
  %208 = vmatpush1.bf16.msra.mxu0 0
  %209 = vmatprep.subr.bf16.mxu0 0
  %210 = vmatpush1.bf16.msra.mxu0 0
  %211 = vmatprep.subr.bf16.mxu0 0
  %212 = vmatpush1.bf16.msra.mxu0 0
  %213 = vmatprep.subr.bf16.mxu0 0
  %214 = vmatpush1.bf16.msra.mxu0 0
  %215 = vmatprep.subr.bf16.mxu0 0
  %216 = vmatpush1.bf16.msra.mxu0 0
  %217 = vmatprep.subr.bf16.mxu0 0
  %218 = vmatpush1.bf16.msra.mxu0 0
  %219 = vmatprep.subr.bf16.mxu0 0
  %220 = vmatpush1.bf16.msra.mxu0 0
  %221 = vmatprep.subr.bf16.mxu0 0
  %222 = vmatpush1.bf16.msra.mxu0 0
  %223 = vmatprep.subr.bf16.mxu0 0
  %224 = vmatpush1.bf16.msra.mxu0 0
  %225 = vmatprep.subr.bf16.mxu0 0
  %226 = vmatpush1.bf16.msra.mxu0 0
  %227 = vmatprep.subr.bf16.mxu0 0
  %228 = vmatpush1.bf16.msra.mxu0 0
  %229 = vmatprep.subr.bf16.mxu0 0
  %230 = vmatpush1.bf16.msra.mxu0 0
  %231 = vmatprep.subr.bf16.mxu0 0
  %232 = vmatpush1.bf16.msra.mxu0 0
  %233 = vmatprep.mubr.bf16.mxu0 0
  %234 = vmatmul.mubr.bf16.gmra.mrb[0].mxu0 %v199
  %v235 = vpop.f32.mrb[0].mxu0
  %v236 = vadd.f32 %v183, %v235
  %v237 = vpop.f32.mrb[0].mxu0
  %v238 = vpop.f32.mrb[0].mxu0
  %v239 = vpop.f32.mrb[0].mxu0
  %240 = vdwg.mxu0
  %241 = vst.msk [vmem:[%s7] sm:$0xff] %vm197, %v236
  // Predicated region
  $region30: #{metadata_encoder.1} parent=0 // pred_check
    _
  $region31: #{metadata_encoder.1} parent=0 // pred_check_branch
    %243 = sbr.rel (0) target = $region33
  $region32: #{metadata_encoder.1} parent=0 // pred_region
    _
  $region33: #{metadata_encoder.1} parent=0 // pred_fallthru
    _
  // Predicated region
  $region34: #{metadata_encoder.1} parent=0 // pred_check
    _
  $region35: #{metadata_encoder.1} parent=0 // pred_check_branch
    %245 = sbr.rel (0) target = $region37
  $region36: #{metadata_encoder.1} parent=0 // pred_region
    _
  $region37: #{metadata_encoder.1} parent=0 // pred_fallthru
    _

</llo_original>
